<compile_context>
chip_gen: v6e
topology: v6e:2x2x1
jax: 0.10.0
libtpu: 0.0.40
codegen_flags: <defaults>
</compile_context>

<pallas_src>
import numpy as np
import jax
import jax.numpy as jnp
from jax.experimental import pallas as pl
from jax.experimental.pallas import tpu as pltpu


def _round_up(x, m):
    return (x + m - 1) // m * m


def gcn_kernel(a_ref, x_ref, o_ref, acc_ref):
    # a_ref:   (tile, tile)  bf16 block of the normalized adjacency A_hat[i, k]
    # x_ref:   (tile, Fp)    bf16 k-block of the node features X[k, :]
    # o_ref:   (tile, Fp)    f32 output block (row tile i)
    # acc_ref: (tile, Fp)    f32 VMEM accumulator (resident across the k axis)
    i = pl.program_id(0)   # destination-node (row) tile
    k = pl.program_id(1)   # source-node (reduction) tile

    @pl.when(k == 0)
    def _():
        acc_ref[...] = jnp.zeros_like(acc_ref)

    acc_ref[...] += jnp.dot(a_ref[...], x_ref[...],
                            preferred_element_type=jnp.float32)

    # Residual (+X): tile_n == tile_k, so the X k-block at k == i covers exactly
    # this output tile's rows -> no separate residual DMA stream needed.
    @pl.when(k == i)
    def _():
        acc_ref[...] += x_ref[...].astype(jnp.float32)

    @pl.when(k == pl.num_programs(1) - 1)
    def _():
        o_ref[...] = acc_ref[...].astype(o_ref.dtype)


def gcn_forward(a_hat, x, *, tile=256, out_dtype=jnp.float32):
    """h = a_hat @ x + x, tiled (rows x K) with an f32 VMEM accumulator.

    a_hat: (N, N) right-normalized adjacency (with self-loops), x: (N, F).
    `tile` is both the row tile and the K tile (sweep 128/256/512; 128 maps
    cleanly onto v5e's 128x128 MXU).
    """
    N, F = x.shape
    assert a_hat.shape == (N, N)
    assert tile % 128 == 0, "tile must be a multiple of 128 (lane width)"

    Fp = _round_up(F, 128)      # lane-dense feature axis (unmasked stores)
    Np = _round_up(N, tile)     # node axis padded to the tile size

    # bf16 inputs: halves HBM bytes on the dominant O(N^2) adjacency stream;
    # f32 accumulation preserves the result.
    a_p = jnp.zeros((Np, Np), jnp.bfloat16).at[:N, :N].set(a_hat.astype(jnp.bfloat16))
    x_p = jnp.zeros((Np, Fp), jnp.bfloat16).at[:N, :F].set(x.astype(jnp.bfloat16))

    n_rows = Np // tile
    n_k = Np // tile            # == n_rows (required by the k == i residual add)

    # TODO(synk): for very large F, add a feature grid axis (tile Fp as well) to
    # keep the (tile, Fp) output/accumulator blocks within the VMEM budget.
    cost = pl.CostEstimate(
        flops=2 * Np * Np * Fp,
        transcendentals=0,
        bytes_accessed=int(a_p.size) * 2 + int(x_p.size) * 2 + Np * Fp * 4,
    )

    out = pl.pallas_call(
        gcn_kernel,
        out_shape=jax.ShapeDtypeStruct((Np, Fp), out_dtype),
        grid_spec=pltpu.PrefetchScalarGridSpec(
            num_scalar_prefetch=0,
            grid=(n_rows, n_k),                                   # reduction axis last
            in_specs=[
                pl.BlockSpec((tile, tile), lambda i, k: (i, k)),  # A_hat (i, k) block
                pl.BlockSpec((tile, Fp), lambda i, k: (k, 0)),    # X k-block
            ],
            out_specs=pl.BlockSpec((tile, Fp), lambda i, k: (i, 0)),
            scratch_shapes=[pltpu.VMEM((tile, Fp), jnp.float32)],
        ),
        compiler_params=pltpu.CompilerParams(
            dimension_semantics=("parallel", "arbitrary"),
            vmem_limit_bytes=32 * 1024 * 1024,
        ),
        cost_estimate=cost,
    )(a_p, x_p)

    return out[:N, :F]


def build_normalized_adjacency(src, dst, num_nodes):
    """Dense A_hat: edge multiplicities + self-loop, right (in-degree) normalization.

    Mirrors the spec's message_computation: per-edge accumulation then divide by
    the in-degree (including the added self-loop).
    """
    adj = np.zeros((num_nodes, num_nodes), dtype=np.float32)
    np.add.at(adj, (dst, src), 1.0)                                # edge src -> dst
    adj[np.arange(num_nodes), np.arange(num_nodes)] += 1.0         # dgl.add_self_loop
    in_deg = adj.sum(axis=1)                                       # in-degree >= 1
    return adj / in_deg[:, None]


if __name__ == "__main__":
    key = jax.random.PRNGKey(0)
    N, F = 200, 32     # num_nodes, in_feats (h_feats unused: weight=False)
    E = 600            # number of random directed edges

    k1, k2, k3 = jax.random.split(key, 3)
    src = np.asarray(jax.random.randint(k1, (E,), 0, N))
    dst = np.asarray(jax.random.randint(k2, (E,), 0, N))
    x = jax.random.normal(k3, (N, F), dtype=jnp.float32)   # g.ndata['h'] == in_feat

    a_hat = jnp.asarray(build_normalized_adjacency(src, dst, N))

    # tile=128 keeps the small demo padded only to 256 and exercises a 2x2 grid
    # (multi-row tiles + K accumulation).  Use 256 for large graphs.
    out = gcn_forward(a_hat, x, tile=128)
    out = jax.block_until_ready(out)

    # Pure-JAX reference on the same bf16-rounded inputs (kernel casts inputs to
    # bf16 but accumulates in f32).
    a_r = a_hat.astype(jnp.bfloat16).astype(jnp.float32)
    x_r = x.astype(jnp.bfloat16).astype(jnp.float32)
    ref = a_r @ x_r + x_r

    assert out.shape == (N, F)
    assert jnp.allclose(out, ref, atol=1e-3, rtol=1e-3), float(jnp.max(jnp.abs(out - ref)))

    print("KERNEL_OK")
</pallas_src>

<mosaic_0001>
module attributes {stable_mosaic.version = 11 : i64} {
  func.func @gcn_kernel(%arg0: i32, %arg1: i32, %arg2: memref<128x128xbf16, #tpu.memory_space<vmem>>, %arg3: memref<128x128xbf16, #tpu.memory_space<vmem>>, %arg4: memref<128x128xf32, #tpu.memory_space<vmem>>, %arg5: memref<128x128xf32, #tpu.memory_space<vmem>>) attributes {dimension_semantics = [#tpu.dimension_semantics<parallel>, #tpu.dimension_semantics<arbitrary>], iteration_bounds = array<i64: 2, 2>, scalar_prefetch = 0 : i64, scratch_operands = 1 : i64, tpu.core_type = #tpu.core_type<tc>, window_params = [{transform_indices = @transform_0, window_bounds = array<i64: 128, 128>}, {transform_indices = @transform_1, window_bounds = array<i64: 128, 128>}, {transform_indices = @transform_2, window_bounds = array<i64: 128, 128>}]} {
    %c0_i32 = arith.constant 0 : i32
    %0 = arith.cmpi eq, %arg1, %c0_i32 : i32
    %1 = arith.extui %0 : i1 to i32
    %c0_i32_0 = arith.constant 0 : i32
    %2 = arith.cmpi ne, %1, %c0_i32_0 : i32
    scf.if %2 {
      %cst_10 = arith.constant 0.000000e+00 : f32
      %15 = vector.broadcast %cst_10 : f32 to vector<128x128xf32>
      %c0_11 = arith.constant 0 : index
      %c0_12 = arith.constant 0 : index
      %16 = vector.load %arg5[%c0_11, %c0_12] : memref<128x128xf32, #tpu.memory_space<vmem>>, vector<128x128xf32>
      tpu.vector_store %arg5[%c0_11, %c0_12], %15 {strides = array<i32>} : memref<128x128xf32, #tpu.memory_space<vmem>>, vector<128x128xf32>,
    } else {
    }
    %c0 = arith.constant 0 : index
    %c0_1 = arith.constant 0 : index
    %3 = vector.load %arg5[%c0, %c0_1] : memref<128x128xf32, #tpu.memory_space<vmem>>, vector<128x128xf32>
    %c0_2 = arith.constant 0 : index
    %c0_3 = arith.constant 0 : index
    %4 = vector.load %arg2[%c0_2, %c0_3] : memref<128x128xbf16, #tpu.memory_space<vmem>>, vector<128x128xbf16>
    %c0_4 = arith.constant 0 : index
    %c0_5 = arith.constant 0 : index
    %5 = vector.load %arg3[%c0_4, %c0_5] : memref<128x128xbf16, #tpu.memory_space<vmem>>, vector<128x128xbf16>
    %cst = arith.constant dense<0.000000e+00> : vector<128x128xf32>
    %6 = tpu.matmul %4, %5, %cst {dimension_numbers = #tpu.dot_dimension_numbers<[1], [0], [0], [1], [0, 0, 1, 1], [], []>} : vector<128x128xbf16>, vector<128x128xbf16>, vector<128x128xf32> -> vector<128x128xf32>
    %7 = arith.addf %3, %6 : vector<128x128xf32>
    %c0_6 = arith.constant 0 : index
    %c0_7 = arith.constant 0 : index
    %8 = vector.load %arg5[%c0_6, %c0_7] : memref<128x128xf32, #tpu.memory_space<vmem>>, vector<128x128xf32>
    tpu.vector_store %arg5[%c0_6, %c0_7], %7 {strides = array<i32>} : memref<128x128xf32, #tpu.memory_space<vmem>>, vector<128x128xf32>,
    %9 = arith.cmpi eq, %arg1, %arg0 : i32
    %10 = arith.extui %9 : i1 to i32
    %c0_i32_8 = arith.constant 0 : i32
    %11 = arith.cmpi ne, %10, %c0_i32_8 : i32
    scf.if %11 {
      %c0_10 = arith.constant 0 : index
      %c0_11 = arith.constant 0 : index
      %15 = vector.load %arg5[%c0_10, %c0_11] : memref<128x128xf32, #tpu.memory_space<vmem>>, vector<128x128xf32>
      %c0_12 = arith.constant 0 : index
      %c0_13 = arith.constant 0 : index
      %16 = vector.load %arg3[%c0_12, %c0_13] : memref<128x128xbf16, #tpu.memory_space<vmem>>, vector<128x128xbf16>
      %17 = arith.extf %16 : vector<128x128xbf16> to vector<128x128xf32>
      %18 = arith.addf %15, %17 : vector<128x128xf32>
      %c0_14 = arith.constant 0 : index
      %c0_15 = arith.constant 0 : index
      %19 = vector.load %arg5[%c0_14, %c0_15] : memref<128x128xf32, #tpu.memory_space<vmem>>, vector<128x128xf32>
      tpu.vector_store %arg5[%c0_14, %c0_15], %18 {strides = array<i32>} : memref<128x128xf32, #tpu.memory_space<vmem>>, vector<128x128xf32>,
    } else {
    }
    %c1_i32 = arith.constant 1 : i32
    %12 = arith.cmpi eq, %arg1, %c1_i32 : i32
    %13 = arith.extui %12 : i1 to i32
    %c0_i32_9 = arith.constant 0 : i32
    %14 = arith.cmpi ne, %13, %c0_i32_9 : i32
    scf.if %14 {
      %c0_10 = arith.constant 0 : index
      %c0_11 = arith.constant 0 : index
      %15 = vector.load %arg5[%c0_10, %c0_11] : memref<128x128xf32, #tpu.memory_space<vmem>>, vector<128x128xf32>
      %c0_12 = arith.constant 0 : index
      %c0_13 = arith.constant 0 : index
      %16 = vector.load %arg4[%c0_12, %c0_13] : memref<128x128xf32, #tpu.memory_space<vmem>>, vector<128x128xf32>
      tpu.vector_store %arg4[%c0_12, %c0_13], %15 {strides = array<i32>} : memref<128x128xf32, #tpu.memory_space<vmem>>, vector<128x128xf32>,
    } else {
    }
    return
  }
  func.func @transform_0(%arg0: i32, %arg1: i32) -> (i32, i32) {
    %c0_i32 = arith.constant 0 : i32
    return %arg0, %arg1 : i32, i32
  }
  func.func @transform_1(%arg0: i32, %arg1: i32) -> (i32, i32) {
    %c0_i32 = arith.constant 0 : i32
    %c0_i32_0 = arith.constant 0 : i32
    return %arg1, %c0_i32 : i32, i32
  }
  func.func @transform_2(%arg0: i32, %arg1: i32) -> (i32, i32) {
    %c0_i32 = arith.constant 0 : i32
    %c0_i32_0 = arith.constant 0 : i32
    return %arg0, %c0_i32 : i32, i32
  }
}

</mosaic_0001>

<llo_original>
// kernel: tpu_custom_call.1
$region0: #{tpu_custom_call.1}
  #allocation0 [shape = 'u32[]', space=smem, size = 0x4, offset = 0x4, fixed_abs, tag = 'smem constant byte address 0x4 - core index']
  #allocation1 [shape = 'u32[144,128]{1,0:T(1,128)}', space=vmem, size = 0x12000, scoped, tag = 'internal scratch']
  #allocation2 [shape = 'f32[128,128]{1,0:T(8,128)}', space=vmem, size = 0x10000, scoped, tag = 'scratch operand']
  %s0 = inlined_call_operand.hbm [shape: bf16[256,256], index: 0, kind: input, shape index: {}]
  %s1 = inlined_call_operand.hbm [shape: bf16[256,128], index: 1, kind: input, shape index: {}]
  %s2 = inlined_call_operand.hbm [shape: f32[256,128], index: 2, kind: output, shape index: {}]
  %s3 = sld [smem:[#allocation0]]
  $region61: #{tpu_custom_call.1} parent=0
    _
  %s5 = ssub.s32 1, %s3
  %s6 = scalar_select 0, %s5, %s3
  $region1: #{tpu_custom_call.1} parent=0
    #allocation3 [shape = 'u8[65536]{0}', space=vmem, size = 0x10000, scoped, tag = 'input window, operand 0']
    #allocation4 [shape = 's32[2]{0}', space=sflag, size = 0x8, scoped, tag = 'scoped memory for tpu_custom_call.1']
    #allocation5 [shape = 's32[2]{0}', space=sflag, size = 0x8, scoped, tag = 'scoped memory for tpu_custom_call.1']
    #allocation6 [shape = 'u8[65536]{0}', space=vmem, size = 0x10000, scoped, tag = 'input window, operand 1']
    #allocation7 [shape = 's32[2]{0}', space=sflag, size = 0x8, scoped, tag = 'scoped memory for tpu_custom_call.1']
    #allocation8 [shape = 'u8[131072]{0}', space=vmem, size = 0x20000, scoped, tag = 'output window, operand 0']
    %7 = vsyncpa [#allocation4], 0
    %s8 = scalar_lea.sflag [#allocation4], 1
    %9 = vsyncpa %s8, 0
    %10 = vsyncpa [#allocation7], 0
    %s11 = scalar_lea.sflag [#allocation7], 1
    %12 = vsyncpa %s11, 0
    %13 = vsyncpa [#allocation5], 0
    %s14 = scalar_lea.sflag [#allocation5], 1
    %15 = vsyncpa %s14, 0
    loop: start=0, step=1, limit=6
    $region2: #{tpu_custom_call.1} parent=1 // loop_pre_header
      _
    $region3: #{tpu_custom_call.1} parent=1 // loop_header
      %s17 = sphi 0, %s21
      %p18 = scmp.ge.s32.totalorder %s17, 6
      %s24 = sphi 0, %s36
      %s25 = sphi 0, %s32
      %s26 = sphi 0, %s24
      %s27 = sphi 0, %s25
      %s28 = sphi 0, %s26
      %s29 = sphi 0, %s27
      %s41 = sphi 0, %s43
      %s44 = sphi 0, %s41
      %s45 = sphi 0, %s44
      %s61 = sphi 0, %s45
      %s67 = sphi 0, %s69
      %s70 = sphi 0, %s67
      %s71 = sphi 0, %s70
      %s87 = sphi 0, %s71
      %s93 = sphi 0, %s95
      %s96 = sphi 0, %s93
      %s97 = sphi 0, %s96
      %s113 = sphi 0, %s97
    $region4: #{tpu_custom_call.1} parent=1 // loop_header_branch
      %20 = sbr.rel (%p18) target = $region8
    $region5: #{tpu_custom_call.1} parent=1 // loop_body
      %s22 = ssub.s32 %s17, 1
      %s23 = ssub.s32 %s17, 2
      %s30 = sadd.s32 1, %s25
      %p31 = scmp.ge.s32.totalorder %s30, 2
      %s32 = scalar_select %p31, 0, %s30
      %s33 = sadd.s32 1, %s24
      %s34 = scalar_select %p31, %s33, %s24
      %p35 = scmp.ge.s32.totalorder %s34, 2
      %s36 = scalar_select %p35, 0, %s34
      %s37 = ssub.s32 %s24, %s36
      %s38 = ssub.s32 %s25, %s32
      %s39 = sor.u32 %s37, %s38
      %p40 = scmp.eq.s32.totalorder %s39, 0
      %s42 = sadd.s32 %s41, 1
      %s43 = scalar_select %p40, %s41, %s42
      %p46 = pneg %p40
      %p47 = scmp.eq.s32.totalorder %s17, 3
      %p48 = por %p46, %p47
      %p49 = scmp.ne.s32.totalorder %s41, %s44
      %p50 = scmp.eq.s32.totalorder %s17, 0
      %p51 = por %p49, %p50
      %p52 = scmp.ne.s32.totalorder %s41, %s44
      %p53 = scmp.eq.s32.totalorder %s22, 3
      %p54 = por %p52, %p53
      %p55 = scmp.ne.s32.totalorder %s44, %s45
      %p56 = scmp.eq.s32.totalorder %s22, 0
      %p57 = por %p55, %p56
      %p58 = scmp.ne.s32.totalorder %s44, %s45
      %p59 = scmp.eq.s32.totalorder %s23, 3
      %p60 = por %p58, %p59
      %p62 = scmp.ne.s32.totalorder %s45, %s61
      %p63 = scmp.eq.s32.totalorder %s23, 0
      %p64 = por %p62, %p63
      %s65 = ssub.s32 %s25, %s32
      %p66 = scmp.eq.s32.totalorder %s65, 0
      %s68 = sadd.s32 %s67, 1
      %s69 = scalar_select %p66, %s67, %s68
      %p72 = pneg %p66
      %p73 = scmp.eq.s32.totalorder %s17, 3
      %p74 = por %p72, %p73
      %p75 = scmp.ne.s32.totalorder %s67, %s70
      %p76 = scmp.eq.s32.totalorder %s17, 0
      %p77 = por %p75, %p76
      %p78 = scmp.ne.s32.totalorder %s67, %s70
      %p79 = scmp.eq.s32.totalorder %s22, 3
      %p80 = por %p78, %p79
      %p81 = scmp.ne.s32.totalorder %s70, %s71
      %p82 = scmp.eq.s32.totalorder %s22, 0
      %p83 = por %p81, %p82
      %p84 = scmp.ne.s32.totalorder %s70, %s71
      %p85 = scmp.eq.s32.totalorder %s23, 3
      %p86 = por %p84, %p85
      %p88 = scmp.ne.s32.totalorder %s71, %s87
      %p89 = scmp.eq.s32.totalorder %s23, 0
      %p90 = por %p88, %p89
      %s91 = ssub.s32 %s24, %s36
      %p92 = scmp.eq.s32.totalorder %s91, 0
      %s94 = sadd.s32 %s93, 1
      %s95 = scalar_select %p92, %s93, %s94
      %p98 = pneg %p92
      %p99 = scmp.eq.s32.totalorder %s17, 3
      %p100 = por %p98, %p99
      %p101 = scmp.ne.s32.totalorder %s93, %s96
      %p102 = scmp.eq.s32.totalorder %s17, 0
      %p103 = por %p101, %p102
      %p104 = scmp.ne.s32.totalorder %s93, %s96
      %p105 = scmp.eq.s32.totalorder %s22, 3
      %p106 = por %p104, %p105
      %p107 = scmp.ne.s32.totalorder %s96, %s97
      %p108 = scmp.eq.s32.totalorder %s22, 0
      %p109 = por %p107, %p108
      %p110 = scmp.ne.s32.totalorder %s96, %s97
      %p111 = scmp.eq.s32.totalorder %s23, 3
      %p112 = por %p110, %p111
      %p114 = scmp.ne.s32.totalorder %s97, %s113
      %p115 = scmp.eq.s32.totalorder %s23, 0
      %p116 = por %p114, %p115
      %p117 = scmp.le.s32.totalorder 1, %s17
      %p118 = scmp.lt.s32.totalorder %s17, 5
      %p119 = pnand %p117, %p118
      %p120 = pneg %p119
      // Predicated region
      $region9: #{tpu_custom_call.1} parent=5 // pred_check
        _
      $region10: #{tpu_custom_call.1} parent=5 // pred_check_branch
        %122 = sbr.rel (%p119) target = $region12
      $region11: #{tpu_custom_call.1} parent=5 // pred_region
        %s123 = ssub.s32 %s17, 1
      $region12: #{tpu_custom_call.1} parent=5 // pred_fallthru
        _
      %p124 = scmp.lt.s32.totalorder %s17, 4
      // Predicated region
      $region13: #{tpu_custom_call.1} parent=5 // pred_check
        %p125 = pneg %p124
      $region14: #{tpu_custom_call.1} parent=5 // pred_check_branch
        %127 = sbr.rel (%p125) target = $region16
      $region15: #{tpu_custom_call.1} parent=5 // pred_region
        // Predicated region
        $region17: #{tpu_custom_call.1} parent=15 // pred_check
          %p128 = pneg %p51
        $region18: #{tpu_custom_call.1} parent=15 // pred_check_branch
          %130 = sbr.rel (%p128) target = $region20
        $region19: #{tpu_custom_call.1} parent=15 // pred_region
          %s131 = sand.u32 %s41, 1
          %s132 = scalar_lea.sflag [#allocation4], %s131
          %s133 = sand.u32 %s41, 1
          %s134 = smul.addr %s133, 64
          %s135 = scalar_lea.vmem [#allocation3], %s134
          %s136 = smul.u32 16, %s24
          %s138 = ssub.s32 1024, 1024
          %139 = vsyncadd %s132, %s138
          %s140 = smul.addr %s136, 2
          %s141 = sadd.s32 %s25, %s140
          %s142 = smul.addr %s141, 64
          %s143 = scalar_lea.hbm %s0, %s142
          %s144 = sshll.u32 %s135, 4
          %s145 = int_to_ptr.vmem [resolvable:$true] %s144
          %150 = dma.hbm_to_vmem [thread:$0]  %s143, 1024, %s145, %s132, 128, 64, 4
        $region20: #{tpu_custom_call.1} parent=15 // pred_fallthru
          _
        // Predicated region
        $region21: #{tpu_custom_call.1} parent=15 // pred_check
          %p151 = pneg %p77
        $region22: #{tpu_custom_call.1} parent=15 // pred_check_branch
          %153 = sbr.rel (%p151) target = $region24
        $region23: #{tpu_custom_call.1} parent=15 // pred_region
          %s154 = sand.u32 %s67, 1
          %s155 = scalar_lea.sflag [#allocation7], %s154
          %s156 = sand.u32 %s67, 1
          %s157 = smul.addr %s156, 64
          %s158 = scalar_lea.vmem [#allocation6], %s157
          %s159 = smul.u32 16, %s25
          %s161 = ssub.s32 1024, 1024
          %162 = vsyncadd %s155, %s161
          %s163 = smul.addr %s159, 64
          %s164 = scalar_lea.hbm %s1, %s163
          %s165 = sshll.u32 %s158, 4
          %s166 = int_to_ptr.vmem [resolvable:$true] %s165
          %171 = dma.hbm_to_vmem [thread:$0]  %s164, 1024, %s166, %s155, 64, 64, 4
        $region24: #{tpu_custom_call.1} parent=15 // pred_fallthru
          _
      $region16: #{tpu_custom_call.1} parent=5 // pred_fallthru
        _
      %p172 = scmp.le.s32.totalorder 1, %s17
      %p173 = scmp.lt.s32.totalorder %s17, 5
      %p174 = pnand %p172, %p173
      %p175 = pneg %p174
      // Predicated region
      $region25: #{tpu_custom_call.1} parent=5 // pred_check
        _
      $region26: #{tpu_custom_call.1} parent=5 // pred_check_branch
        %177 = sbr.rel (%p174) target = $region28
      $region27: #{tpu_custom_call.1} parent=5 // pred_region
        %s178 = ssub.s32 %s17, 1
        %s179 = sand.u32 %s44, 1
        %s180 = scalar_lea.sflag [#allocation4], %s179
        %s181 = sand.u32 %s44, 1
        %s182 = smul.addr %s181, 64
        %s183 = scalar_lea.vmem [#allocation3], %s182
        // Predicated region
        $region29: #{tpu_custom_call.1} parent=27 // pred_check
          %p184 = pneg %p57
        $region30: #{tpu_custom_call.1} parent=27 // pred_check_branch
          %186 = sbr.rel (%p184) target = $region32
        $region31: #{tpu_custom_call.1} parent=27 // pred_region
          %187 = dma.done %s180, 1024
        $region32: #{tpu_custom_call.1} parent=27 // pred_fallthru
          _
        %s188 = sand.u32 %s70, 1
        %s189 = scalar_lea.sflag [#allocation7], %s188
        %s190 = sand.u32 %s70, 1
        %s191 = smul.addr %s190, 64
        %s192 = scalar_lea.vmem [#allocation6], %s191
        // Predicated region
        $region33: #{tpu_custom_call.1} parent=27 // pred_check
          %p193 = pneg %p83
        $region34: #{tpu_custom_call.1} parent=27 // pred_check_branch
          %195 = sbr.rel (%p193) target = $region36
        $region35: #{tpu_custom_call.1} parent=27 // pred_region
          %196 = dma.done %s189, 1024
        $region36: #{tpu_custom_call.1} parent=27 // pred_fallthru
          _
        %s197 = sand.u32 %s44, 1
        %s198 = scalar_lea.sflag [#allocation4], %s197
        %s199 = sand.u32 %s44, 1
        %s200 = smul.addr %s199, 64
        %s201 = scalar_lea.vmem [#allocation3], %s200
        %p202 = pneg %p57
        %p203 = pneg %p54
        %s204 = sand.u32 %s70, 1
        %s205 = scalar_lea.sflag [#allocation7], %s204
        %s206 = sand.u32 %s70, 1
        %s207 = smul.addr %s206, 64
        %s208 = scalar_lea.vmem [#allocation6], %s207
        %p209 = pneg %p83
        %p210 = pneg %p80
        %p211 = pneg %p109
        %p212 = pneg %p106
        %s213 = sand.u32 %s96, 1
        %s214 = scalar_lea.sflag [#allocation5], %s213
        %s215 = sand.u32 %s96, 1
        %s216 = smul.addr %s215, 128
        %s217 = scalar_lea.vmem [#allocation8], %s216
        %s218 = smul.u32 16, %s26
        %s219 = smul.u32 16, %s27
        %s220 = smul.u32 16, %s26
        %p222 = scmp.eq.s32.totalorder %s27, 0
        // Predicated region
        $region37: #{tpu_custom_call.1} parent=27 // pred_check
          %p223 = pneg %p222
        $region38: #{tpu_custom_call.1} parent=27 // pred_check_branch
          %225 = sbr.rel (%p223) target = $region40
        $region39: #{tpu_custom_call.1} parent=27 // pred_region
          %226 = vst [vmem:[#allocation2] sm:$0xff] 0.0
          %227 = vst [vmem:[#allocation2 + $0x8] sm:$0xff] 0.0
          %228 = vst [vmem:[#allocation2 + $0x10] sm:$0xff] 0.0
          %229 = vst [vmem:[#allocation2 + $0x18] sm:$0xff] 0.0
          %230 = vst [vmem:[#allocation2 + $0x20] sm:$0xff] 0.0
          %231 = vst [vmem:[#allocation2 + $0x28] sm:$0xff] 0.0
          %232 = vst [vmem:[#allocation2 + $0x30] sm:$0xff] 0.0
          %233 = vst [vmem:[#allocation2 + $0x38] sm:$0xff] 0.0
          %234 = vst [vmem:[#allocation2 + $0x40] sm:$0xff] 0.0
          %235 = vst [vmem:[#allocation2 + $0x48] sm:$0xff] 0.0
          %236 = vst [vmem:[#allocation2 + $0x50] sm:$0xff] 0.0
          %237 = vst [vmem:[#allocation2 + $0x58] sm:$0xff] 0.0
          %238 = vst [vmem:[#allocation2 + $0x60] sm:$0xff] 0.0
          %239 = vst [vmem:[#allocation2 + $0x68] sm:$0xff] 0.0
          %240 = vst [vmem:[#allocation2 + $0x70] sm:$0xff] 0.0
          %241 = vst [vmem:[#allocation2 + $0x78] sm:$0xff] 0.0
        $region40: #{tpu_custom_call.1} parent=27 // pred_fallthru
          _
        %v242 = vld [vmem:[#allocation2] sm:$0xff]
        %v243 = vld [vmem:[#allocation2 + $0x8] sm:$0xff]
        %v244 = vld [vmem:[#allocation2 + $0x10] sm:$0xff]
        %v245 = vld [vmem:[#allocation2 + $0x18] sm:$0xff]
        %v246 = vld [vmem:[#allocation2 + $0x20] sm:$0xff]
        %v247 = vld [vmem:[#allocation2 + $0x28] sm:$0xff]
        %v248 = vld [vmem:[#allocation2 + $0x30] sm:$0xff]
        %v249 = vld [vmem:[#allocation2 + $0x38] sm:$0xff]
        %v250 = vld [vmem:[#allocation2 + $0x40] sm:$0xff]
        %v251 = vld [vmem:[#allocation2 + $0x48] sm:$0xff]
        %v252 = vld [vmem:[#allocation2 + $0x50] sm:$0xff]
        %v253 = vld [vmem:[#allocation2 + $0x58] sm:$0xff]
        %v254 = vld [vmem:[#allocation2 + $0x60] sm:$0xff]
        %v255 = vld [vmem:[#allocation2 + $0x68] sm:$0xff]
        %v256 = vld [vmem:[#allocation2 + $0x70] sm:$0xff]
        %v257 = vld [vmem:[#allocation2 + $0x78] sm:$0xff]
        %v258 = vld [vmem:[%s183] sm:$0xf]
        %v259 = vld [vmem:[%s183 + $0x4] sm:$0xf]
        %v260 = vld [vmem:[%s183 + $0x8] sm:$0xf]
        %v261 = vld [vmem:[%s183 + $0xc] sm:$0xf]
        %v262 = vld [vmem:[%s183 + $0x10] sm:$0xf]
        %v263 = vld [vmem:[%s183 + $0x14] sm:$0xf]
        %v264 = vld [vmem:[%s183 + $0x18] sm:$0xf]
        %v265 = vld [vmem:[%s183 + $0x1c] sm:$0xf]
        %v266 = vld [vmem:[%s183 + $0x20] sm:$0xf]
        %v267 = vld [vmem:[%s183 + $0x24] sm:$0xf]
        %v268 = vld [vmem:[%s183 + $0x28] sm:$0xf]
        %v269 = vld [vmem:[%s183 + $0x2c] sm:$0xf]
        %v270 = vld [vmem:[%s183 + $0x30] sm:$0xf]
        %v271 = vld [vmem:[%s183 + $0x34] sm:$0xf]
        %v272 = vld [vmem:[%s183 + $0x38] sm:$0xf]
        %v273 = vld [vmem:[%s183 + $0x3c] sm:$0xf]
        %v274 = vld [vmem:[%s192] sm:$0xf]
        %v275 = vld [vmem:[%s192 + $0x4] sm:$0xf]
        %v276 = vld [vmem:[%s192 + $0x8] sm:$0xf]
        %v277 = vld [vmem:[%s192 + $0xc] sm:$0xf]
        %v278 = vld [vmem:[%s192 + $0x10] sm:$0xf]
        %v279 = vld [vmem:[%s192 + $0x14] sm:$0xf]
        %v280 = vld [vmem:[%s192 + $0x18] sm:$0xf]
        %v281 = vld [vmem:[%s192 + $0x1c] sm:$0xf]
        %v282 = vld [vmem:[%s192 + $0x20] sm:$0xf]
        %v283 = vld [vmem:[%s192 + $0x24] sm:$0xf]
        %v284 = vld [vmem:[%s192 + $0x28] sm:$0xf]
        %v285 = vld [vmem:[%s192 + $0x2c] sm:$0xf]
        %v286 = vld [vmem:[%s192 + $0x30] sm:$0xf]
        %v287 = vld [vmem:[%s192 + $0x34] sm:$0xf]
        %v288 = vld [vmem:[%s192 + $0x38] sm:$0xf]
        %v289 = vld [vmem:[%s192 + $0x3c] sm:$0xf]
        %v306 = vunpack.c.l.b16 %v258
        %v307 = vunpack.c.l.b16 %v259
        %v308 = vunpack.c.l.b16 %v260
        %v309 = vunpack.c.l.b16 %v261
        %v310 = vunpack.c.l.b16 %v262
        %v311 = vunpack.c.l.b16 %v263
        %v312 = vunpack.c.l.b16 %v264
        %v313 = vunpack.c.l.b16 %v265
        %v314 = vunpack.c.l.b16 %v266
        %v315 = vunpack.c.l.b16 %v267
        %v316 = vunpack.c.l.b16 %v268
        %v317 = vunpack.c.l.b16 %v269
        %v318 = vunpack.c.l.b16 %v270
        %v319 = vunpack.c.l.b16 %v271
        %v320 = vunpack.c.l.b16 %v272
        %v321 = vunpack.c.l.b16 %v273
        %v322 = vpack.c.b16 %v307, %v306
        %v323 = vpack.c.b16 %v309, %v308
        %v324 = vpack.c.b16 %v311, %v310
        %v325 = vpack.c.b16 %v313, %v312
        %v326 = vpack.c.b16 %v315, %v314
        %v327 = vpack.c.b16 %v317, %v316
        %v328 = vpack.c.b16 %v319, %v318
        %v329 = vpack.c.b16 %v321, %v320
        %v354 = vunpack.c.l.b16 %v274
        %v355 = vunpack.c.l.b16 %v275
        %v356 = vunpack.c.l.b16 %v276
        %v357 = vunpack.c.l.b16 %v277
        %v358 = vunpack.c.l.b16 %v278
        %v359 = vunpack.c.l.b16 %v279
        %v360 = vunpack.c.l.b16 %v280
        %v361 = vunpack.c.l.b16 %v281
        %v362 = vunpack.c.l.b16 %v282
        %v363 = vunpack.c.l.b16 %v283
        %v364 = vunpack.c.l.b16 %v284
        %v365 = vunpack.c.l.b16 %v285
        %v366 = vunpack.c.l.b16 %v286
        %v367 = vunpack.c.l.b16 %v287
        %v368 = vunpack.c.l.b16 %v288
        %v369 = vunpack.c.l.b16 %v289
        %v370 = vpack.c.b16 %v355, %v354
        %v371 = vpack.c.b16 %v357, %v356
        %v372 = vpack.c.b16 %v359, %v358
        %v373 = vpack.c.b16 %v361, %v360
        %v374 = vpack.c.b16 %v363, %v362
        %v375 = vpack.c.b16 %v365, %v364
        %v376 = vpack.c.b16 %v367, %v366
        %v377 = vpack.c.b16 %v369, %v368
        %386 = vmatprep.subr.bf16.mxu0 0
        %387 = vmatpush1.bf16.msra.mxu0 %v377
        %388 = vmatprep.subr.bf16.mxu0 0
        %389 = vmatpush1.bf16.msra.mxu0 %v376
        %390 = vmatprep.subr.bf16.mxu0 0
        %391 = vmatpush1.bf16.msra.mxu0 %v375
        %392 = vmatprep.subr.bf16.mxu0 0
        %393 = vmatpush1.bf16.msra.mxu0 %v374
        %394 = vmatprep.subr.bf16.mxu0 0
        %395 = vmatpush1.bf16.msra.mxu0 %v373
        %396 = vmatprep.subr.bf16.mxu0 0
        %397 = vmatpush1.bf16.msra.mxu0 %v372
        %398 = vmatprep.subr.bf16.mxu0 0
        %399 = vmatpush1.bf16.msra.mxu0 %v371
        %400 = vmatprep.subr.bf16.mxu0 0
        %401 = vmatpush1.bf16.msra.mxu0 %v370
        %402 = vmatprep.subr.bf16.mxu0 0
        %403 = vmatpush2.bf16.msra.mxu0 0
        %404 = vmatprep.subr.bf16.mxu0 0
        %405 = vmatpush2.bf16.msra.mxu0 0
        %406 = vmatprep.subr.bf16.mxu0 0
        %407 = vmatpush2.bf16.msra.mxu0 0
        %408 = vmatprep.subr.bf16.mxu0 0
        %409 = vmatpush2.bf16.msra.mxu0 0
        %410 = vmatprep.subr.bf16.mxu0 0
        %411 = vmatpush2.bf16.msra.mxu0 0
        %412 = vmatprep.subr.bf16.mxu0 0
        %413 = vmatpush2.bf16.msra.mxu0 0
        %414 = vmatprep.subr.bf16.mxu0 0
        %415 = vmatpush2.bf16.msra.mxu0 0
        %416 = vmatprep.subr.bf16.mxu0 0
        %417 = vmatpush2.bf16.msra.mxu0 0
        %418 = vmatprep.mubr.bf16.mxu0 0
        %419 = vmatmul.mubr.bf16.gmra.mxu0 %v322
        %v420 = vpop.f32.mrf.mxu0
        %v421 = vadd.f32 0.0, %v420
        %v422 = vpop.f32.mrf.mxu0
        %v423 = vpop.f32.mrf.mxu0
        %v424 = vadd.f32 0.0, %v423
        %v425 = vpop.f32.mrf.mxu0
        %426 = vmatprep.mubr.bf16.mxu0 0
        %427 = vmatmul.mubr.bf16.gmra.mxu0 %v323
        %v428 = vpop.f32.mrf.mxu0
        %v429 = vadd.f32 0.0, %v428
        %v430 = vpop.f32.mrf.mxu0
        %v431 = vpop.f32.mrf.mxu0
        %v432 = vadd.f32 0.0, %v431
        %v433 = vpop.f32.mrf.mxu0
        %434 = vmatprep.mubr.bf16.mxu0 0
        %435 = vmatmul.mubr.bf16.gmra.mxu0 %v324
        %v436 = vpop.f32.mrf.mxu0
        %v437 = vadd.f32 0.0, %v436
        %v438 = vpop.f32.mrf.mxu0
        %v439 = vpop.f32.mrf.mxu0
        %v440 = vadd.f32 0.0, %v439
        %v441 = vpop.f32.mrf.mxu0
        %442 = vmatprep.mubr.bf16.mxu0 0
        %443 = vmatmul.mubr.bf16.gmra.mxu0 %v325
        %v444 = vpop.f32.mrf.mxu0
        %v445 = vadd.f32 0.0, %v444
        %v446 = vpop.f32.mrf.mxu0
        %v447 = vpop.f32.mrf.mxu0
        %v448 = vadd.f32 0.0, %v447
        %v449 = vpop.f32.mrf.mxu0
        %450 = vmatprep.mubr.bf16.mxu0 0
        %451 = vmatmul.mubr.bf16.gmra.mxu0 %v326
        %v452 = vpop.f32.mrf.mxu0
        %v453 = vadd.f32 0.0, %v452
        %v454 = vpop.f32.mrf.mxu0
        %v455 = vpop.f32.mrf.mxu0
        %v456 = vadd.f32 0.0, %v455
        %v457 = vpop.f32.mrf.mxu0
        %458 = vmatprep.mubr.bf16.mxu0 0
        %459 = vmatmul.mubr.bf16.gmra.mxu0 %v327
        %v460 = vpop.f32.mrf.mxu0
        %v461 = vadd.f32 0.0, %v460
        %v462 = vpop.f32.mrf.mxu0
        %v463 = vpop.f32.mrf.mxu0
        %v464 = vadd.f32 0.0, %v463
        %v465 = vpop.f32.mrf.mxu0
        %466 = vmatprep.mubr.bf16.mxu0 0
        %467 = vmatmul.mubr.bf16.gmra.mxu0 %v328
        %v468 = vpop.f32.mrf.mxu0
        %v469 = vadd.f32 0.0, %v468
        %v470 = vpop.f32.mrf.mxu0
        %v471 = vpop.f32.mrf.mxu0
        %v472 = vadd.f32 0.0, %v471
        %v473 = vpop.f32.mrf.mxu0
        %474 = vmatprep.mubr.bf16.mxu0 0
        %475 = vmatmul.mubr.bf16.gmra.mxu0 %v329
        %v476 = vpop.f32.mrf.mxu0
        %v477 = vadd.f32 0.0, %v476
        %v478 = vpop.f32.mrf.mxu0
        %v479 = vpop.f32.mrf.mxu0
        %v480 = vadd.f32 0.0, %v479
        %v481 = vpop.f32.mrf.mxu0
        %482 = vdwg.mxu0
        %v483 = vadd.f32 %v242, %v421
        %v484 = vadd.f32 %v243, %v424
        %v485 = vadd.f32 %v244, %v429
        %v486 = vadd.f32 %v245, %v432
        %v487 = vadd.f32 %v246, %v437
        %v488 = vadd.f32 %v247, %v440
        %v489 = vadd.f32 %v248, %v445
        %v490 = vadd.f32 %v249, %v448
        %v491 = vadd.f32 %v250, %v453
        %v492 = vadd.f32 %v251, %v456
        %v493 = vadd.f32 %v252, %v461
        %v494 = vadd.f32 %v253, %v464
        %v495 = vadd.f32 %v254, %v469
        %v496 = vadd.f32 %v255, %v472
        %v497 = vadd.f32 %v256, %v477
        %v498 = vadd.f32 %v257, %v480
        %499 = vst [vmem:[#allocation2] sm:$0xff] %v483
        %500 = vst [vmem:[#allocation2 + $0x8] sm:$0xff] %v484
        %501 = vst [vmem:[#allocation2 + $0x10] sm:$0xff] %v485
        %502 = vst [vmem:[#allocation2 + $0x18] sm:$0xff] %v486
        %503 = vst [vmem:[#allocation2 + $0x20] sm:$0xff] %v487
        %504 = vst [vmem:[#allocation2 + $0x28] sm:$0xff] %v488
        %505 = vst [vmem:[#allocation2 + $0x30] sm:$0xff] %v489
        %506 = vst [vmem:[#allocation2 + $0x38] sm:$0xff] %v490
        %507 = vst [vmem:[#allocation2 + $0x40] sm:$0xff] %v491
        %508 = vst [vmem:[#allocation2 + $0x48] sm:$0xff] %v492
        %509 = vst [vmem:[#allocation2 + $0x50] sm:$0xff] %v493
        %510 = vst [vmem:[#allocation2 + $0x58] sm:$0xff] %v494
        %511 = vst [vmem:[#allocation2 + $0x60] sm:$0xff] %v495
        %512 = vst [vmem:[#allocation2 + $0x68] sm:$0xff] %v496
        %513 = vst [vmem:[#allocation2 + $0x70] sm:$0xff] %v497
        %514 = vst [vmem:[#allocation2 + $0x78] sm:$0xff] %v498
        %p515 = scmp.eq.s32.totalorder %s27, %s26
        // Predicated region
        $region41: #{tpu_custom_call.1} parent=27 // pred_check
          %p516 = pneg %p515
        $region42: #{tpu_custom_call.1} parent=27 // pred_check_branch
          %518 = sbr.rel (%p516) target = $region44
        $region43: #{tpu_custom_call.1} parent=27 // pred_region
          %v519 = vld [vmem:[#allocation2] sm:$0xff]
          %v520 = vld [vmem:[#allocation2 + $0x8] sm:$0xff]
          %v521 = vld [vmem:[#allocation2 + $0x10] sm:$0xff]
          %v522 = vld [vmem:[#allocation2 + $0x18] sm:$0xff]
          %v523 = vld [vmem:[#allocation2 + $0x20] sm:$0xff]
          %v524 = vld [vmem:[#allocation2 + $0x28] sm:$0xff]
          %v525 = vld [vmem:[#allocation2 + $0x30] sm:$0xff]
          %v526 = vld [vmem:[#allocation2 + $0x38] sm:$0xff]
          %v527 = vld [vmem:[#allocation2 + $0x40] sm:$0xff]
          %v528 = vld [vmem:[#allocation2 + $0x48] sm:$0xff]
          %v529 = vld [vmem:[#allocation2 + $0x50] sm:$0xff]
          %v530 = vld [vmem:[#allocation2 + $0x58] sm:$0xff]
          %v531 = vld [vmem:[#allocation2 + $0x60] sm:$0xff]
          %v532 = vld [vmem:[#allocation2 + $0x68] sm:$0xff]
          %v533 = vld [vmem:[#allocation2 + $0x70] sm:$0xff]
          %v534 = vld [vmem:[#allocation2 + $0x78] sm:$0xff]
          %v535 = vld [vmem:[%s192] sm:$0xf]
          %v536 = vld [vmem:[%s192 + $0x4] sm:$0xf]
          %v537 = vld [vmem:[%s192 + $0x8] sm:$0xf]
          %v538 = vld [vmem:[%s192 + $0xc] sm:$0xf]
          %v539 = vld [vmem:[%s192 + $0x10] sm:$0xf]
          %v540 = vld [vmem:[%s192 + $0x14] sm:$0xf]
          %v541 = vld [vmem:[%s192 + $0x18] sm:$0xf]
          %v542 = vld [vmem:[%s192 + $0x1c] sm:$0xf]
          %v543 = vld [vmem:[%s192 + $0x20] sm:$0xf]
          %v544 = vld [vmem:[%s192 + $0x24] sm:$0xf]
          %v545 = vld [vmem:[%s192 + $0x28] sm:$0xf]
          %v546 = vld [vmem:[%s192 + $0x2c] sm:$0xf]
          %v547 = vld [vmem:[%s192 + $0x30] sm:$0xf]
          %v548 = vld [vmem:[%s192 + $0x34] sm:$0xf]
          %v549 = vld [vmem:[%s192 + $0x38] sm:$0xf]
          %v550 = vld [vmem:[%s192 + $0x3c] sm:$0xf]
          %v551 = vunpack.c.l.bf16 %v535
          %v552 = vunpack.c.l.bf16 %v536
          %v553 = vunpack.c.l.bf16 %v537
          %v554 = vunpack.c.l.bf16 %v538
          %v555 = vunpack.c.l.bf16 %v539
          %v556 = vunpack.c.l.bf16 %v540
          %v557 = vunpack.c.l.bf16 %v541
          %v558 = vunpack.c.l.bf16 %v542
          %v559 = vunpack.c.l.bf16 %v543
          %v560 = vunpack.c.l.bf16 %v544
          %v561 = vunpack.c.l.bf16 %v545
          %v562 = vunpack.c.l.bf16 %v546
          %v563 = vunpack.c.l.bf16 %v547
          %v564 = vunpack.c.l.bf16 %v548
          %v565 = vunpack.c.l.bf16 %v549
          %v566 = vunpack.c.l.bf16 %v550
          %v567 = vadd.f32 %v519, %v551
          %v568 = vadd.f32 %v520, %v552
          %v569 = vadd.f32 %v521, %v553
          %v570 = vadd.f32 %v522, %v554
          %v571 = vadd.f32 %v523, %v555
          %v572 = vadd.f32 %v524, %v556
          %v573 = vadd.f32 %v525, %v557
          %v574 = vadd.f32 %v526, %v558
          %v575 = vadd.f32 %v527, %v559
          %v576 = vadd.f32 %v528, %v560
          %v577 = vadd.f32 %v529, %v561
          %v578 = vadd.f32 %v530, %v562
          %v579 = vadd.f32 %v531, %v563
          %v580 = vadd.f32 %v532, %v564
          %v581 = vadd.f32 %v533, %v565
          %v582 = vadd.f32 %v534, %v566
          %583 = vst [vmem:[#allocation2] sm:$0xff] %v567
          %584 = vst [vmem:[#allocation2 + $0x8] sm:$0xff] %v568
          %585 = vst [vmem:[#allocation2 + $0x10] sm:$0xff] %v569
          %586 = vst [vmem:[#allocation2 + $0x18] sm:$0xff] %v570
          %587 = vst [vmem:[#allocation2 + $0x20] sm:$0xff] %v571
          %588 = vst [vmem:[#allocation2 + $0x28] sm:$0xff] %v572
          %589 = vst [vmem:[#allocation2 + $0x30] sm:$0xff] %v573
          %590 = vst [vmem:[#allocation2 + $0x38] sm:$0xff] %v574
          %591 = vst [vmem:[#allocation2 + $0x40] sm:$0xff] %v575
          %592 = vst [vmem:[#allocation2 + $0x48] sm:$0xff] %v576
          %593 = vst [vmem:[#allocation2 + $0x50] sm:$0xff] %v577
          %594 = vst [vmem:[#allocation2 + $0x58] sm:$0xff] %v578
          %595 = vst [vmem:[#allocation2 + $0x60] sm:$0xff] %v579
          %596 = vst [vmem:[#allocation2 + $0x68] sm:$0xff] %v580
          %597 = vst [vmem:[#allocation2 + $0x70] sm:$0xff] %v581
          %598 = vst [vmem:[#allocation2 + $0x78] sm:$0xff] %v582
        $region44: #{tpu_custom_call.1} parent=27 // pred_fallthru
          _
        %p599 = scmp.eq.s32.totalorder %s27, 1
        // Predicated region
        $region45: #{tpu_custom_call.1} parent=27 // pred_check
          %p600 = pneg %p599
        $region46: #{tpu_custom_call.1} parent=27 // pred_check_branch
          %602 = sbr.rel (%p600) target = $region48
        $region47: #{tpu_custom_call.1} parent=27 // pred_region
          %v603 = vld [vmem:[#allocation2] sm:$0xff]
          %v604 = vld [vmem:[#allocation2 + $0x8] sm:$0xff]
          %v605 = vld [vmem:[#allocation2 + $0x10] sm:$0xff]
          %v606 = vld [vmem:[#allocation2 + $0x18] sm:$0xff]
          %v607 = vld [vmem:[#allocation2 + $0x20] sm:$0xff]
          %v608 = vld [vmem:[#allocation2 + $0x28] sm:$0xff]
          %v609 = vld [vmem:[#allocation2 + $0x30] sm:$0xff]
          %v610 = vld [vmem:[#allocation2 + $0x38] sm:$0xff]
          %v611 = vld [vmem:[#allocation2 + $0x40] sm:$0xff]
          %v612 = vld [vmem:[#allocation2 + $0x48] sm:$0xff]
          %v613 = vld [vmem:[#allocation2 + $0x50] sm:$0xff]
          %v614 = vld [vmem:[#allocation2 + $0x58] sm:$0xff]
          %v615 = vld [vmem:[#allocation2 + $0x60] sm:$0xff]
          %v616 = vld [vmem:[#allocation2 + $0x68] sm:$0xff]
          %v617 = vld [vmem:[#allocation2 + $0x70] sm:$0xff]
          %v618 = vld [vmem:[#allocation2 + $0x78] sm:$0xff]
          %619 = vst [vmem:[%s217] sm:$0xff] %v603
          %620 = vst [vmem:[%s217 + $0x8] sm:$0xff] %v604
          %621 = vst [vmem:[%s217 + $0x10] sm:$0xff] %v605
          %622 = vst [vmem:[%s217 + $0x18] sm:$0xff] %v606
          %623 = vst [vmem:[%s217 + $0x20] sm:$0xff] %v607
          %624 = vst [vmem:[%s217 + $0x28] sm:$0xff] %v608
          %625 = vst [vmem:[%s217 + $0x30] sm:$0xff] %v609
          %626 = vst [vmem:[%s217 + $0x38] sm:$0xff] %v610
          %627 = vst [vmem:[%s217 + $0x40] sm:$0xff] %v611
          %628 = vst [vmem:[%s217 + $0x48] sm:$0xff] %v612
          %629 = vst [vmem:[%s217 + $0x50] sm:$0xff] %v613
          %630 = vst [vmem:[%s217 + $0x58] sm:$0xff] %v614
          %631 = vst [vmem:[%s217 + $0x60] sm:$0xff] %v615
          %632 = vst [vmem:[%s217 + $0x68] sm:$0xff] %v616
          %633 = vst [vmem:[%s217 + $0x70] sm:$0xff] %v617
          %634 = vst [vmem:[%s217 + $0x78] sm:$0xff] %v618
        $region48: #{tpu_custom_call.1} parent=27 // pred_fallthru
          _
        %s635 = sand.u32 %s96, 1
        %s636 = scalar_lea.sflag [#allocation5], %s635
        %s637 = sand.u32 %s96, 1
        %s638 = smul.addr %s637, 128
        %s639 = scalar_lea.vmem [#allocation8], %s638
        // Predicated region
        $region49: #{tpu_custom_call.1} parent=27 // pred_check
          %p640 = pneg %p106
        $region50: #{tpu_custom_call.1} parent=27 // pred_check_branch
          %642 = sbr.rel (%p640) target = $region52
        $region51: #{tpu_custom_call.1} parent=27 // pred_region
          %s643 = smul.u32 16, %s26
          %s645 = ssub.s32 2048, 2048
          %646 = vsyncadd %s636, %s645
          %s647 = smul.addr %s643, 128
          %s648 = scalar_lea.hbm %s2, %s647
          %s649 = sshll.u32 %s639, 4
          %s650 = int_to_ptr.vmem [resolvable:$true] %s649
          %655 = dma.vmem_to_hbm [thread:$0]  %s650, 2048, %s648, %s636, 128, 128, 8
        $region52: #{tpu_custom_call.1} parent=27 // pred_fallthru
          _
      $region28: #{tpu_custom_call.1} parent=5 // pred_fallthru
        _
      %p656 = scmp.le.s32.totalorder 2, %s17
      // Predicated region
      $region53: #{tpu_custom_call.1} parent=5 // pred_check
        %p657 = pneg %p656
      $region54: #{tpu_custom_call.1} parent=5 // pred_check_branch
        %659 = sbr.rel (%p657) target = $region56
      $region55: #{tpu_custom_call.1} parent=5 // pred_region
        %s660 = ssub.s32 %s17, 2
        // Predicated region
        $region57: #{tpu_custom_call.1} parent=55 // pred_check
          %p661 = pneg %p112
        $region58: #{tpu_custom_call.1} parent=55 // pred_check_branch
          %663 = sbr.rel (%p661) target = $region60
        $region59: #{tpu_custom_call.1} parent=55 // pred_region
          %s664 = sand.u32 %s97, 1
          %s665 = scalar_lea.sflag [#allocation5], %s664
          %s666 = sand.u32 %s97, 1
          %s667 = smul.addr %s666, 128
          %s668 = scalar_lea.vmem [#allocation8], %s667
          %669 = dma.done %s665, 2048
        $region60: #{tpu_custom_call.1} parent=55 // pred_fallthru
          _
      $region56: #{tpu_custom_call.1} parent=5 // pred_fallthru
        _
    $region6: #{tpu_custom_call.1} parent=1 // loop_footer
      %s21 = sadd.s32 1, %s17
    $region7: #{tpu_custom_call.1} parent=1 // loop_footer_branch
      %16 = sbr.rel target = $region3
    $region8: #{tpu_custom_call.1} parent=1 // loop_exit
      _
    %670 = vsyncpa [#allocation4], 1
    %s671 = scalar_lea.sflag [#allocation4], 1
    %672 = vsyncpa %s671, 1
    %673 = vsyncpa [#allocation7], 1
    %s674 = scalar_lea.sflag [#allocation7], 1
    %675 = vsyncpa %s674, 1
    %676 = vsyncpa [#allocation5], 1
    %s677 = scalar_lea.sflag [#allocation5], 1
    %678 = vsyncpa %s677, 1

</llo_original>
